<compile_context>
chip_gen: v5e
topology: v5e:2x2
jax: 0.10.0
libtpu: 0.0.40
codegen_flags: <defaults>
</compile_context>

<pallas_src>
import functools
from typing import NamedTuple

import numpy as np
import jax
import jax.numpy as jnp
from jax.experimental import pallas as pl
from jax.experimental.pallas import tpu as pltpu


def _round_up(x, m):
    return ((x + m - 1) // m) * m


class MlpDims(NamedTuple):
    obs_dim: int
    hidden: int
    act_dim: int
    obs_pad: int
    hid_pad: int
    act_pad: int


def prepare_params(params):
    """One-time weight prep (zero-pad + bf16 cast), hoisted out of the forward.

    The forward pass is weight-bandwidth-bound at small RL batch sizes, so
    re-padding / re-casting weights every call roughly triples weight traffic.
    Call this once and cache the result next to the params.
    """
    w1, b1, w2, b2, w3, b3 = params
    obs_dim, hidden = w1.shape
    act_dim = w3.shape[1]
    obs_pad = _round_up(obs_dim, 128)
    hid_pad = _round_up(hidden, 128)
    act_pad = _round_up(act_dim, 128)   # lane-dense output -> unmasked vst

    def padw(w, rows, cols):
        w = jnp.asarray(w, jnp.bfloat16)
        return jnp.pad(w, ((0, rows - w.shape[0]), (0, cols - w.shape[1])))

    def padb(b, cols):
        b = jnp.asarray(b, jnp.float32).reshape(1, -1)
        return jnp.pad(b, ((0, 0), (0, cols - b.shape[1])))

    weights = (
        padw(w1, obs_pad, hid_pad), padb(b1, hid_pad),
        padw(w2, hid_pad, hid_pad), padb(b2, hid_pad),
        padw(w3, hid_pad, act_pad), padb(b3, act_pad),
    )
    dims = MlpDims(obs_dim, hidden, act_dim, obs_pad, hid_pad, act_pad)
    # TODO(synk): optional fp8 (v7x) / int8 (v5e/v6e) weight quantization with
    # per-output-channel scales for a further ~2x cut in weight HBM bytes.
    return weights, dims


def _mlp_kernel(x_ref, w1_ref, b1_ref, w2_ref, b2_ref, w3_ref, b3_ref, o_ref):
    # Layer 1: bf16 matmul on the MXU, f32 accumulate, bias + ReLU in f32.
    h1 = jnp.dot(x_ref[...], w1_ref[...], preferred_element_type=jnp.float32)
    h1 = jnp.maximum(h1 + b1_ref[...], 0.0)
    # Layer 2
    h2 = jnp.dot(h1.astype(w2_ref.dtype), w2_ref[...],
                 preferred_element_type=jnp.float32)
    h2 = jnp.maximum(h2 + b2_ref[...], 0.0)
    # Output layer: logits (no activation); bias add folded into the store.
    logits = jnp.dot(h2.astype(w3_ref.dtype), w3_ref[...],
                     preferred_element_type=jnp.float32)
    o_ref[...] = (logits + b3_ref[...]).astype(o_ref.dtype)


def _batch_tile(n):
    # bf16 packs 16 rows per vreg; 256 rows fills the 256-wide MXU on v6e/v7x.
    # Ensure >=2 grid steps whenever the batch allows it so v7x's second
    # TensorCore gets work via dimension_semantics=("parallel",).
    n16 = _round_up(n, 16)
    tb = min(256, n16)
    if n16 // tb < 2 and n16 >= 32:
        tb = _round_up(n16 // 2, 16)
    return tb


@functools.lru_cache(maxsize=1)
def _vmem_capacity_bytes():
    try:
        return int(pltpu.get_tpu_info().vmem_capacity_bytes)
    except Exception:
        return 64 * 1024 * 1024  # conservative: v7x per-core physical VMEM


_BUFFERED = getattr(pl, "Buffered", None)


def _resident_spec(shape):
    # Weights/biases: constant block index -> DMA'd once, VMEM-resident across
    # the batch grid.  Buffered(1) disables the default double-buffering so
    # they occupy VMEM only once (key on v7x's 64 MiB VMEM).
    if _BUFFERED is not None:
        try:
            return pl.BlockSpec(shape, lambda i: (0, 0),
                                pipeline_mode=_BUFFERED(1))
        except TypeError:
            pass
    return pl.BlockSpec(shape, lambda i: (0, 0))


def tianshou_net_adapter_forward(s, weights, dims, out_dtype=jnp.float32):
    """Adapter forward: returns only the logits (drops Tianshou's `state`)."""
    w1, b1, w2, b2, w3, b3 = weights
    n = s.shape[0]
    x = s.reshape(n, -1)  # flatten like Tianshou Net (row-major == torch.flatten)
    assert x.shape[1] == dims.obs_dim

    tb = _batch_tile(n)
    n_pad = _round_up(n, tb)

    # Fused cast + pad of the streamed activations (no zeros+scatter).
    x = x.astype(jnp.bfloat16)
    if n_pad != n or dims.obs_pad != dims.obs_dim:
        x = jnp.pad(x, ((0, n_pad - n), (0, dims.obs_pad - dims.obs_dim)))

    grid = (n_pad // tb,)
    out_isize = np.dtype(out_dtype).itemsize

    # Generation-aware VMEM budget from the actual padded buffer sizes.
    weight_bytes = (w1.size + w2.size + w3.size) * 2          # bf16, single copy
    bias_bytes = (b1.size + b2.size + b3.size) * 4
    stream_bytes = 2 * tb * dims.obs_pad * 2 + 2 * tb * dims.act_pad * out_isize
    scratch_bytes = 2 * tb * dims.hid_pad * 4                  # f32 h1/h2
    vmem_needed = weight_bytes + bias_bytes + stream_bytes + scratch_bytes
    vmem_cap = _vmem_capacity_bytes()
    vmem_limit = int(min(max(int(vmem_needed * 1.5), 32 * 1024 * 1024),
                         int(vmem_cap * 0.85)))
    # TODO(synk): when weight_bytes exceeds ~half of vmem_cap, fall back to a
    # K-tiled grid (reduction axis over obs_pad last, f32 accumulator scratch
    # + pl.when init/finalize) instead of fully VMEM-resident weights.

    flops = 2 * n_pad * (dims.obs_pad * dims.hid_pad
                         + dims.hid_pad * dims.hid_pad
                         + dims.hid_pad * dims.act_pad)
    bytes_accessed = (n_pad * dims.obs_pad * 2 + weight_bytes + bias_bytes
                      + n_pad * dims.act_pad * out_isize)

    out = pl.pallas_call(
        _mlp_kernel,
        out_shape=jax.ShapeDtypeStruct((n_pad, dims.act_pad), out_dtype),
        grid=grid,
        in_specs=[
            pl.BlockSpec((tb, dims.obs_pad), lambda i: (i, 0)),  # streamed batch
            _resident_spec((dims.obs_pad, dims.hid_pad)),
            _resident_spec((1, dims.hid_pad)),
            _resident_spec((dims.hid_pad, dims.hid_pad)),
            _resident_spec((1, dims.hid_pad)),
            _resident_spec((dims.hid_pad, dims.act_pad)),
            _resident_spec((1, dims.act_pad)),
        ],
        out_specs=pl.BlockSpec((tb, dims.act_pad), lambda i: (i, 0)),
        compiler_params=pltpu.CompilerParams(
            dimension_semantics=("parallel",),   # v7x: shard batch over 2 TCs
            vmem_limit_bytes=vmem_limit,
        ),
        cost_estimate=pl.CostEstimate(
            flops=flops, transcendentals=0, bytes_accessed=bytes_accessed),
    )(x, w1, b1, w2, b2, w3, b3)

    # Tianshou model returns (logits, state); the adapter keeps element [0].
    # (The slice only drops padding; consumers that accept the lane-dense
    #  padded (n_pad, act_pad) slab can take `out` directly and skip it.)
    return out[:n, :dims.act_dim]


def init_params(key, obs_dim, hidden, act_dim):
    k1, k2, k3 = jax.random.split(key, 3)
    scale1 = 1.0 / jnp.sqrt(obs_dim)
    scale2 = 1.0 / jnp.sqrt(hidden)
    w1 = jax.random.uniform(k1, (obs_dim, hidden), jnp.float32, -scale1, scale1)
    b1 = jnp.zeros((1, hidden), jnp.float32)
    w2 = jax.random.uniform(k2, (hidden, hidden), jnp.float32, -scale2, scale2)
    b2 = jnp.zeros((1, hidden), jnp.float32)
    w3 = jax.random.uniform(k3, (hidden, act_dim), jnp.float32, -scale2, scale2)
    b3 = jnp.zeros((1, act_dim), jnp.float32)
    return (w1, b1, w2, b2, w3, b3)


if __name__ == "__main__":
    key = jax.random.PRNGKey(0)
    k_obs, k_par = jax.random.split(key)

    # Small observation consistent with an image-like RL obs: [N, C, H, W]
    batch, C, H, W = 2, 4, 16, 16
    hidden, act_dim = 128, 8

    s = jax.random.normal(k_obs, (batch, C, H, W), jnp.float32)
    params = init_params(k_par, C * H * W, hidden, act_dim)

    # One-time weight prep (hoisted out of the per-call forward).
    weights, dims = prepare_params(params)
    jax.block_until_ready(weights)

    fwd = jax.jit(tianshou_net_adapter_forward, static_argnums=(2,))
    logits = fwd(s, weights, dims)
    jax.block_until_ready(logits)

    # Reference in plain JAX, mirroring the kernel's bf16-in / f32-accum math.
    w1, b1, w2, b2, w3, b3 = params
    bf = lambda a: a.astype(jnp.bfloat16).astype(jnp.float32)
    xf = s.reshape(batch, -1)
    ref = jnp.maximum(bf(xf) @ bf(w1) + b1, 0.0)
    ref = jnp.maximum(bf(ref) @ bf(w2) + b2, 0.0)
    ref = bf(ref) @ bf(w3) + b3

    assert logits.shape == (batch, act_dim)
    assert jnp.allclose(logits, ref, atol=1e-2, rtol=1e-2)

    print("KERNEL_OK")
</pallas_src>

<mosaic_0001>
module attributes {stable_mosaic.version = 11 : i64} {
  func.func @_mlp_kernel(%arg0: i32, %arg1: memref<16x1024xbf16, #tpu.memory_space<vmem>>, %arg2: memref<1024x128xbf16, #tpu.memory_space<vmem>>, %arg3: memref<1x128xf32, #tpu.memory_space<vmem>>, %arg4: memref<128x128xbf16, #tpu.memory_space<vmem>>, %arg5: memref<1x128xf32, #tpu.memory_space<vmem>>, %arg6: memref<128x128xbf16, #tpu.memory_space<vmem>>, %arg7: memref<1x128xf32, #tpu.memory_space<vmem>>, %arg8: memref<16x128xf32, #tpu.memory_space<vmem>>) attributes {dimension_semantics = [#tpu.dimension_semantics<parallel>], iteration_bounds = array<i64: 1>, scalar_prefetch = 0 : i64, scratch_operands = 0 : i64, tpu.core_type = #tpu.core_type<tc>, window_params = [{transform_indices = @transform_0, window_bounds = array<i64: 16, 1024>}, {pipeline_mode = #tpu.pipeline_mode<synchronous>, transform_indices = @transform_1, window_bounds = array<i64: 1024, 128>}, {pipeline_mode = #tpu.pipeline_mode<synchronous>, transform_indices = @transform_2, window_bounds = array<i64: 1, 128>}, {pipeline_mode = #tpu.pipeline_mode<synchronous>, transform_indices = @transform_3, window_bounds = array<i64: 128, 128>}, {pipeline_mode = #tpu.pipeline_mode<synchronous>, transform_indices = @transform_4, window_bounds = array<i64: 1, 128>}, {pipeline_mode = #tpu.pipeline_mode<synchronous>, transform_indices = @transform_5, window_bounds = array<i64: 128, 128>}, {pipeline_mode = #tpu.pipeline_mode<synchronous>, transform_indices = @transform_6, window_bounds = array<i64: 1, 128>}, {transform_indices = @transform_7, window_bounds = array<i64: 16, 128>}]} {
    %c0 = arith.constant 0 : index
    %c0_0 = arith.constant 0 : index
    %0 = vector.load %arg1[%c0, %c0_0] : memref<16x1024xbf16, #tpu.memory_space<vmem>>, vector<16x1024xbf16>
    %c0_1 = arith.constant 0 : index
    %c0_2 = arith.constant 0 : index
    %1 = vector.load %arg2[%c0_1, %c0_2] : memref<1024x128xbf16, #tpu.memory_space<vmem>>, vector<1024x128xbf16>
    %cst = arith.constant dense<0.000000e+00> : vector<16x128xf32>
    %2 = tpu.matmul %0, %1, %cst {dimension_numbers = #tpu.dot_dimension_numbers<[1], [0], [0], [1], [0, 0, 1, 1], [], []>} : vector<16x1024xbf16>, vector<1024x128xbf16>, vector<16x128xf32> -> vector<16x128xf32>
    %c0_3 = arith.constant 0 : index
    %c0_4 = arith.constant 0 : index
    %3 = vector.load %arg3[%c0_3, %c0_4] : memref<1x128xf32, #tpu.memory_space<vmem>>, vector<1x128xf32>
    %4 = vector.broadcast %3 : vector<1x128xf32> to vector<16x128xf32>
    %5 = arith.addf %2, %4 : vector<16x128xf32>
    %cst_5 = arith.constant 0.000000e+00 : f32
    %6 = vector.broadcast %cst_5 : f32 to vector<16x128xf32>
    %7 = arith.maximumf %5, %6 : vector<16x128xf32>
    %8 = arith.truncf %7 : vector<16x128xf32> to vector<16x128xbf16>
    %c0_6 = arith.constant 0 : index
    %c0_7 = arith.constant 0 : index
    %9 = vector.load %arg4[%c0_6, %c0_7] : memref<128x128xbf16, #tpu.memory_space<vmem>>, vector<128x128xbf16>
    %cst_8 = arith.constant dense<0.000000e+00> : vector<16x128xf32>
    %10 = tpu.matmul %8, %9, %cst_8 {dimension_numbers = #tpu.dot_dimension_numbers<[1], [0], [0], [1], [0, 0, 1, 1], [], []>} : vector<16x128xbf16>, vector<128x128xbf16>, vector<16x128xf32> -> vector<16x128xf32>
    %c0_9 = arith.constant 0 : index
    %c0_10 = arith.constant 0 : index
    %11 = vector.load %arg5[%c0_9, %c0_10] : memref<1x128xf32, #tpu.memory_space<vmem>>, vector<1x128xf32>
    %12 = vector.broadcast %11 : vector<1x128xf32> to vector<16x128xf32>
    %13 = arith.addf %10, %12 : vector<16x128xf32>
    %cst_11 = arith.constant 0.000000e+00 : f32
    %14 = vector.broadcast %cst_11 : f32 to vector<16x128xf32>
    %15 = arith.maximumf %13, %14 : vector<16x128xf32>
    %16 = arith.truncf %15 : vector<16x128xf32> to vector<16x128xbf16>
    %c0_12 = arith.constant 0 : index
    %c0_13 = arith.constant 0 : index
    %17 = vector.load %arg6[%c0_12, %c0_13] : memref<128x128xbf16, #tpu.memory_space<vmem>>, vector<128x128xbf16>
    %cst_14 = arith.constant dense<0.000000e+00> : vector<16x128xf32>
    %18 = tpu.matmul %16, %17, %cst_14 {dimension_numbers = #tpu.dot_dimension_numbers<[1], [0], [0], [1], [0, 0, 1, 1], [], []>} : vector<16x128xbf16>, vector<128x128xbf16>, vector<16x128xf32> -> vector<16x128xf32>
    %c0_15 = arith.constant 0 : index
    %c0_16 = arith.constant 0 : index
    %19 = vector.load %arg7[%c0_15, %c0_16] : memref<1x128xf32, #tpu.memory_space<vmem>>, vector<1x128xf32>
    %20 = vector.broadcast %19 : vector<1x128xf32> to vector<16x128xf32>
    %21 = arith.addf %18, %20 : vector<16x128xf32>
    %c0_17 = arith.constant 0 : index
    %c0_18 = arith.constant 0 : index
    %22 = vector.load %arg8[%c0_17, %c0_18] : memref<16x128xf32, #tpu.memory_space<vmem>>, vector<16x128xf32>
    tpu.vector_store %arg8[%c0_17, %c0_18], %21 {strides = array<i32>} : memref<16x128xf32, #tpu.memory_space<vmem>>, vector<16x128xf32>,
    return
  }
  func.func @transform_0(%arg0: i32) -> (i32, i32) {
    %c0_i32 = arith.constant 0 : i32
    %c0_i32_0 = arith.constant 0 : i32
    return %arg0, %c0_i32 : i32, i32
  }
  func.func @transform_1(%arg0: i32) -> (i32, i32) {
    %c0_i32 = arith.constant 0 : i32
    %c0_i32_0 = arith.constant 0 : i32
    %c0_i32_1 = arith.constant 0 : i32
    return %c0_i32, %c0_i32_0 : i32, i32
  }
  func.func @transform_2(%arg0: i32) -> (i32, i32) {
    %c0_i32 = arith.constant 0 : i32
    %c0_i32_0 = arith.constant 0 : i32
    %c0_i32_1 = arith.constant 0 : i32
    return %c0_i32, %c0_i32_0 : i32, i32
  }
  func.func @transform_3(%arg0: i32) -> (i32, i32) {
    %c0_i32 = arith.constant 0 : i32
    %c0_i32_0 = arith.constant 0 : i32
    %c0_i32_1 = arith.constant 0 : i32
    return %c0_i32, %c0_i32_0 : i32, i32
  }
  func.func @transform_4(%arg0: i32) -> (i32, i32) {
    %c0_i32 = arith.constant 0 : i32
    %c0_i32_0 = arith.constant 0 : i32
    %c0_i32_1 = arith.constant 0 : i32
    return %c0_i32, %c0_i32_0 : i32, i32
  }
  func.func @transform_5(%arg0: i32) -> (i32, i32) {
    %c0_i32 = arith.constant 0 : i32
    %c0_i32_0 = arith.constant 0 : i32
    %c0_i32_1 = arith.constant 0 : i32
    return %c0_i32, %c0_i32_0 : i32, i32
  }
  func.func @transform_6(%arg0: i32) -> (i32, i32) {
    %c0_i32 = arith.constant 0 : i32
    %c0_i32_0 = arith.constant 0 : i32
    %c0_i32_1 = arith.constant 0 : i32
    return %c0_i32, %c0_i32_0 : i32, i32
  }
  func.func @transform_7(%arg0: i32) -> (i32, i32) {
    %c0_i32 = arith.constant 0 : i32
    %c0_i32_0 = arith.constant 0 : i32
    return %arg0, %c0_i32 : i32, i32
  }
}

</mosaic_0001>

<llo_original>
// kernel: tianshou_net_adapter_forward.1
$region0: #{tianshou_net_adapter_forward.1}
  #allocation0 [shape = 'u32[]', space=smem, size = 0x4, offset = 0x4, fixed_abs, tag = 'smem constant byte address 0x4 - core index']
  #allocation1 [shape = 'u32[72,128]{1,0:T(1,128)}', space=vmem, size = 0x9000, scoped, tag = 'internal scratch']
  %s0 = inlined_call_operand.vmem [shape: bf16[16,1024], index: 0, kind: input, shape index: {}]
  %s1 = inlined_call_operand.hbm [shape: bf16[1024,128], index: 1, kind: input, shape index: {}]
  %s2 = inlined_call_operand.vmem [shape: f32[1,128], index: 2, kind: input, shape index: {}]
  %s3 = inlined_call_operand.vmem [shape: bf16[128,128], index: 3, kind: input, shape index: {}]
  %s4 = inlined_call_operand.vmem [shape: f32[1,128], index: 4, kind: input, shape index: {}]
  %s5 = inlined_call_operand.vmem [shape: bf16[128,128], index: 5, kind: input, shape index: {}]
  %s6 = inlined_call_operand.vmem [shape: f32[1,128], index: 6, kind: input, shape index: {}]
  %s7 = inlined_call_operand.vmem [shape: f32[16,128], index: 7, kind: output, shape index: {}]
  %s8 = sld [smem:[#allocation0]]
  $region42: #{tianshou_net_adapter_forward.1} parent=0
    _
  %s10 = ssub.s32 1, %s8
  %s11 = scalar_select 0, %s10, %s8
  $region1: #{tianshou_net_adapter_forward.1} parent=0
    #allocation2 [shape = 'u8[262144]{0}', space=vmem, size = 0x40000, scoped, tag = 'input window, operand 1, single buffered']
    #allocation3 [shape = 's32[1]{0}', space=sflag, size = 0x4, scoped, tag = 'scoped memory for tianshou_net_adapter_forward.1']
    %12 = vsyncpa [#allocation3], 0
    // Predicated region
    $region2: #{tianshou_net_adapter_forward.1} parent=1 // pred_check
      _
    $region3: #{tianshou_net_adapter_forward.1} parent=1 // pred_check_branch
      %14 = sbr.rel (0) target = $region5
    $region4: #{tianshou_net_adapter_forward.1} parent=1 // pred_region
      _
    $region5: #{tianshou_net_adapter_forward.1} parent=1 // pred_fallthru
      _
    // Predicated region
    $region6: #{tianshou_net_adapter_forward.1} parent=1 // pred_check
      _
    $region7: #{tianshou_net_adapter_forward.1} parent=1 // pred_check_branch
      %16 = sbr.rel (0) target = $region9
    $region8: #{tianshou_net_adapter_forward.1} parent=1 // pred_region
      %18 = vsyncadd [#allocation3], 0
      %s19 = sshll.u32 %s1, 4
      %s20 = int_to_ptr.hbm [resolvable:$true] %s19
      %s21 = sshll.u32 [#allocation2], 4
      %s22 = int_to_ptr.vmem [resolvable:$true] %s21
      %27 = dma.hbm_to_vmem [thread:$0]  %s20, 8192, %s22, [#allocation3], 64, 64, 4
    $region9: #{tianshou_net_adapter_forward.1} parent=1 // pred_fallthru
      _
    // Predicated region
    $region10: #{tianshou_net_adapter_forward.1} parent=1 // pred_check
      _
    $region11: #{tianshou_net_adapter_forward.1} parent=1 // pred_check_branch
      %29 = sbr.rel (0) target = $region13
    $region12: #{tianshou_net_adapter_forward.1} parent=1 // pred_region
      _
    $region13: #{tianshou_net_adapter_forward.1} parent=1 // pred_fallthru
      _
    // Predicated region
    $region14: #{tianshou_net_adapter_forward.1} parent=1 // pred_check
      _
    $region15: #{tianshou_net_adapter_forward.1} parent=1 // pred_check_branch
      %31 = sbr.rel (0) target = $region17
    $region16: #{tianshou_net_adapter_forward.1} parent=1 // pred_region
      _
    $region17: #{tianshou_net_adapter_forward.1} parent=1 // pred_fallthru
      _
    // Predicated region
    $region18: #{tianshou_net_adapter_forward.1} parent=1 // pred_check
      _
    $region19: #{tianshou_net_adapter_forward.1} parent=1 // pred_check_branch
      %33 = sbr.rel (0) target = $region21
    $region20: #{tianshou_net_adapter_forward.1} parent=1 // pred_region
      _
    $region21: #{tianshou_net_adapter_forward.1} parent=1 // pred_fallthru
      _
    // Predicated region
    $region22: #{tianshou_net_adapter_forward.1} parent=1 // pred_check
      _
    $region23: #{tianshou_net_adapter_forward.1} parent=1 // pred_check_branch
      %35 = sbr.rel (0) target = $region25
    $region24: #{tianshou_net_adapter_forward.1} parent=1 // pred_region
      _
    $region25: #{tianshou_net_adapter_forward.1} parent=1 // pred_fallthru
      _
    // Predicated region
    $region26: #{tianshou_net_adapter_forward.1} parent=1 // pred_check
      _
    $region27: #{tianshou_net_adapter_forward.1} parent=1 // pred_check_branch
      %37 = sbr.rel (0) target = $region29
    $region28: #{tianshou_net_adapter_forward.1} parent=1 // pred_region
      _
    $region29: #{tianshou_net_adapter_forward.1} parent=1 // pred_fallthru
      _
    // Predicated region
    $region30: #{tianshou_net_adapter_forward.1} parent=1 // pred_check
      _
    $region31: #{tianshou_net_adapter_forward.1} parent=1 // pred_check_branch
      %39 = sbr.rel (0) target = $region33
    $region32: #{tianshou_net_adapter_forward.1} parent=1 // pred_region
      %41 = dma.done [#allocation3], 8192
    $region33: #{tianshou_net_adapter_forward.1} parent=1 // pred_fallthru
      _
    %v42 = vld [vmem:[%s0] sm:$0xff]
    %v43 = vld [vmem:[%s0 + $0x8] sm:$0xff]
    %v44 = vld [vmem:[%s0 + $0x10] sm:$0xff]
    %v45 = vld [vmem:[%s0 + $0x18] sm:$0xff]
    %v46 = vld [vmem:[%s0 + $0x20] sm:$0xff]
    %v47 = vld [vmem:[%s0 + $0x28] sm:$0xff]
    %v48 = vld [vmem:[%s0 + $0x30] sm:$0xff]
    %v49 = vld [vmem:[%s0 + $0x38] sm:$0xff]
    %v50 = vld [vmem:[#allocation2] sm:$0xf]
    %v51 = vld [vmem:[#allocation2 + $0x4] sm:$0xf]
    %v52 = vld [vmem:[#allocation2 + $0x8] sm:$0xf]
    %v53 = vld [vmem:[#allocation2 + $0xc] sm:$0xf]
    %v54 = vld [vmem:[#allocation2 + $0x10] sm:$0xf]
    %v55 = vld [vmem:[#allocation2 + $0x14] sm:$0xf]
    %v56 = vld [vmem:[#allocation2 + $0x18] sm:$0xf]
    %v57 = vld [vmem:[#allocation2 + $0x1c] sm:$0xf]
    %v58 = vld [vmem:[#allocation2 + $0x20] sm:$0xf]
    %v59 = vld [vmem:[#allocation2 + $0x24] sm:$0xf]
    %v60 = vld [vmem:[#allocation2 + $0x28] sm:$0xf]
    %v61 = vld [vmem:[#allocation2 + $0x2c] sm:$0xf]
    %v62 = vld [vmem:[#allocation2 + $0x30] sm:$0xf]
    %v63 = vld [vmem:[#allocation2 + $0x34] sm:$0xf]
    %v64 = vld [vmem:[#allocation2 + $0x38] sm:$0xf]
    %v65 = vld [vmem:[#allocation2 + $0x3c] sm:$0xf]
    %v66 = vld [vmem:[#allocation2 + $0x40] sm:$0xf]
    %v67 = vld [vmem:[#allocation2 + $0x44] sm:$0xf]
    %v68 = vld [vmem:[#allocation2 + $0x48] sm:$0xf]
    %v69 = vld [vmem:[#allocation2 + $0x4c] sm:$0xf]
    %v70 = vld [vmem:[#allocation2 + $0x50] sm:$0xf]
    %v71 = vld [vmem:[#allocation2 + $0x54] sm:$0xf]
    %v72 = vld [vmem:[#allocation2 + $0x58] sm:$0xf]
    %v73 = vld [vmem:[#allocation2 + $0x5c] sm:$0xf]
    %v74 = vld [vmem:[#allocation2 + $0x60] sm:$0xf]
    %v75 = vld [vmem:[#allocation2 + $0x64] sm:$0xf]
    %v76 = vld [vmem:[#allocation2 + $0x68] sm:$0xf]
    %v77 = vld [vmem:[#allocation2 + $0x6c] sm:$0xf]
    %v78 = vld [vmem:[#allocation2 + $0x70] sm:$0xf]
    %v79 = vld [vmem:[#allocation2 + $0x74] sm:$0xf]
    %v80 = vld [vmem:[#allocation2 + $0x78] sm:$0xf]
    %v81 = vld [vmem:[#allocation2 + $0x7c] sm:$0xf]
    %v82 = vld [vmem:[#allocation2 + $0x80] sm:$0xf]
    %v83 = vld [vmem:[#allocation2 + $0x84] sm:$0xf]
    %v84 = vld [vmem:[#allocation2 + $0x88] sm:$0xf]
    %v85 = vld [vmem:[#allocation2 + $0x8c] sm:$0xf]
    %v86 = vld [vmem:[#allocation2 + $0x90] sm:$0xf]
    %v87 = vld [vmem:[#allocation2 + $0x94] sm:$0xf]
    %v88 = vld [vmem:[#allocation2 + $0x98] sm:$0xf]
    %v89 = vld [vmem:[#allocation2 + $0x9c] sm:$0xf]
    %v90 = vld [vmem:[#allocation2 + $0xa0] sm:$0xf]
    %v91 = vld [vmem:[#allocation2 + $0xa4] sm:$0xf]
    %v92 = vld [vmem:[#allocation2 + $0xa8] sm:$0xf]
    %v93 = vld [vmem:[#allocation2 + $0xac] sm:$0xf]
    %v94 = vld [vmem:[#allocation2 + $0xb0] sm:$0xf]
    %v95 = vld [vmem:[#allocation2 + $0xb4] sm:$0xf]
    %v96 = vld [vmem:[#allocation2 + $0xb8] sm:$0xf]
    %v97 = vld [vmem:[#allocation2 + $0xbc] sm:$0xf]
    %v98 = vld [vmem:[#allocation2 + $0xc0] sm:$0xf]
    %v99 = vld [vmem:[#allocation2 + $0xc4] sm:$0xf]
    %v100 = vld [vmem:[#allocation2 + $0xc8] sm:$0xf]
    %v101 = vld [vmem:[#allocation2 + $0xcc] sm:$0xf]
    %v102 = vld [vmem:[#allocation2 + $0xd0] sm:$0xf]
    %v103 = vld [vmem:[#allocation2 + $0xd4] sm:$0xf]
    %v104 = vld [vmem:[#allocation2 + $0xd8] sm:$0xf]
    %v105 = vld [vmem:[#allocation2 + $0xdc] sm:$0xf]
    %v106 = vld [vmem:[#allocation2 + $0xe0] sm:$0xf]
    %v107 = vld [vmem:[#allocation2 + $0xe4] sm:$0xf]
    %v108 = vld [vmem:[#allocation2 + $0xe8] sm:$0xf]
    %v109 = vld [vmem:[#allocation2 + $0xec] sm:$0xf]
    %v110 = vld [vmem:[#allocation2 + $0xf0] sm:$0xf]
    %v111 = vld [vmem:[#allocation2 + $0xf4] sm:$0xf]
    %v112 = vld [vmem:[#allocation2 + $0xf8] sm:$0xf]
    %v113 = vld [vmem:[#allocation2 + $0xfc] sm:$0xf]
    %v114 = vld [vmem:[#allocation2 + $0x100] sm:$0xf]
    %v115 = vld [vmem:[#allocation2 + $0x104] sm:$0xf]
    %v116 = vld [vmem:[#allocation2 + $0x108] sm:$0xf]
    %v117 = vld [vmem:[#allocation2 + $0x10c] sm:$0xf]
    %v118 = vld [vmem:[#allocation2 + $0x110] sm:$0xf]
    %v119 = vld [vmem:[#allocation2 + $0x114] sm:$0xf]
    %v120 = vld [vmem:[#allocation2 + $0x118] sm:$0xf]
    %v121 = vld [vmem:[#allocation2 + $0x11c] sm:$0xf]
    %v122 = vld [vmem:[#allocation2 + $0x120] sm:$0xf]
    %v123 = vld [vmem:[#allocation2 + $0x124] sm:$0xf]
    %v124 = vld [vmem:[#allocation2 + $0x128] sm:$0xf]
    %v125 = vld [vmem:[#allocation2 + $0x12c] sm:$0xf]
    %v126 = vld [vmem:[#allocation2 + $0x130] sm:$0xf]
    %v127 = vld [vmem:[#allocation2 + $0x134] sm:$0xf]
    %v128 = vld [vmem:[#allocation2 + $0x138] sm:$0xf]
    %v129 = vld [vmem:[#allocation2 + $0x13c] sm:$0xf]
    %v130 = vld [vmem:[#allocation2 + $0x140] sm:$0xf]
    %v131 = vld [vmem:[#allocation2 + $0x144] sm:$0xf]
    %v132 = vld [vmem:[#allocation2 + $0x148] sm:$0xf]
    %v133 = vld [vmem:[#allocation2 + $0x14c] sm:$0xf]
    %v134 = vld [vmem:[#allocation2 + $0x150] sm:$0xf]
    %v135 = vld [vmem:[#allocation2 + $0x154] sm:$0xf]
    %v136 = vld [vmem:[#allocation2 + $0x158] sm:$0xf]
    %v137 = vld [vmem:[#allocation2 + $0x15c] sm:$0xf]
    %v138 = vld [vmem:[#allocation2 + $0x160] sm:$0xf]
    %v139 = vld [vmem:[#allocation2 + $0x164] sm:$0xf]
    %v140 = vld [vmem:[#allocation2 + $0x168] sm:$0xf]
    %v141 = vld [vmem:[#allocation2 + $0x16c] sm:$0xf]
    %v142 = vld [vmem:[#allocation2 + $0x170] sm:$0xf]
    %v143 = vld [vmem:[#allocation2 + $0x174] sm:$0xf]
    %v144 = vld [vmem:[#allocation2 + $0x178] sm:$0xf]
    %v145 = vld [vmem:[#allocation2 + $0x17c] sm:$0xf]
    %v146 = vld [vmem:[#allocation2 + $0x180] sm:$0xf]
    %v147 = vld [vmem:[#allocation2 + $0x184] sm:$0xf]
    %v148 = vld [vmem:[#allocation2 + $0x188] sm:$0xf]
    %v149 = vld [vmem:[#allocation2 + $0x18c] sm:$0xf]
    %v150 = vld [vmem:[#allocation2 + $0x190] sm:$0xf]
    %v151 = vld [vmem:[#allocation2 + $0x194] sm:$0xf]
    %v152 = vld [vmem:[#allocation2 + $0x198] sm:$0xf]
    %v153 = vld [vmem:[#allocation2 + $0x19c] sm:$0xf]
    %v154 = vld [vmem:[#allocation2 + $0x1a0] sm:$0xf]
    %v155 = vld [vmem:[#allocation2 + $0x1a4] sm:$0xf]
    %v156 = vld [vmem:[#allocation2 + $0x1a8] sm:$0xf]
    %v157 = vld [vmem:[#allocation2 + $0x1ac] sm:$0xf]
    %v158 = vld [vmem:[#allocation2 + $0x1b0] sm:$0xf]
    %v159 = vld [vmem:[#allocation2 + $0x1b4] sm:$0xf]
    %v160 = vld [vmem:[#allocation2 + $0x1b8] sm:$0xf]
    %v161 = vld [vmem:[#allocation2 + $0x1bc] sm:$0xf]
    %v162 = vld [vmem:[#allocation2 + $0x1c0] sm:$0xf]
    %v163 = vld [vmem:[#allocation2 + $0x1c4] sm:$0xf]
    %v164 = vld [vmem:[#allocation2 + $0x1c8] sm:$0xf]
    %v165 = vld [vmem:[#allocation2 + $0x1cc] sm:$0xf]
    %v166 = vld [vmem:[#allocation2 + $0x1d0] sm:$0xf]
    %v167 = vld [vmem:[#allocation2 + $0x1d4] sm:$0xf]
    %v168 = vld [vmem:[#allocation2 + $0x1d8] sm:$0xf]
    %v169 = vld [vmem:[#allocation2 + $0x1dc] sm:$0xf]
    %v170 = vld [vmem:[#allocation2 + $0x1e0] sm:$0xf]
    %v171 = vld [vmem:[#allocation2 + $0x1e4] sm:$0xf]
    %v172 = vld [vmem:[#allocation2 + $0x1e8] sm:$0xf]
    %v173 = vld [vmem:[#allocation2 + $0x1ec] sm:$0xf]
    %v174 = vld [vmem:[#allocation2 + $0x1f0] sm:$0xf]
    %v175 = vld [vmem:[#allocation2 + $0x1f4] sm:$0xf]
    %v176 = vld [vmem:[#allocation2 + $0x1f8] sm:$0xf]
    %v177 = vld [vmem:[#allocation2 + $0x1fc] sm:$0xf]
    %v178 = vld [vmem:[%s2] sm:$0x1]
    %v180 = vperm.slane %v178, 0
    %v190 = vunpack.c.l.b16 %v42
    %v191 = vunpack.c.h.b16 %v42
    %v192 = vunpack.c.l.b16 %v43
    %v193 = vunpack.c.h.b16 %v43
    %v194 = vunpack.c.l.b16 %v44
    %v195 = vunpack.c.h.b16 %v44
    %v196 = vunpack.c.l.b16 %v45
    %v197 = vunpack.c.h.b16 %v45
    %v198 = vunpack.c.l.b16 %v46
    %v199 = vunpack.c.h.b16 %v46
    %v200 = vunpack.c.l.b16 %v47
    %v201 = vunpack.c.h.b16 %v47
    %v202 = vunpack.c.l.b16 %v48
    %v203 = vunpack.c.h.b16 %v48
    %v204 = vunpack.c.l.b16 %v49
    %v205 = vunpack.c.h.b16 %v49
    %v206 = vpack.c.b16 %v198, %v190
    %v207 = vpack.c.b16 %v199, %v191
    %v208 = vpack.c.b16 %v200, %v192
    %v209 = vpack.c.b16 %v201, %v193
    %v210 = vpack.c.b16 %v202, %v194
    %v211 = vpack.c.b16 %v203, %v195
    %v212 = vpack.c.b16 %v204, %v196
    %v213 = vpack.c.b16 %v205, %v197
    %v350 = vunpack.c.l.b16 %v50
    %v351 = vunpack.c.l.b16 %v51
    %v352 = vunpack.c.l.b16 %v52
    %v353 = vunpack.c.l.b16 %v53
    %v354 = vunpack.c.l.b16 %v54
    %v355 = vunpack.c.l.b16 %v55
    %v356 = vunpack.c.l.b16 %v56
    %v357 = vunpack.c.l.b16 %v57
    %v358 = vunpack.c.l.b16 %v58
    %v359 = vunpack.c.l.b16 %v59
    %v360 = vunpack.c.l.b16 %v60
    %v361 = vunpack.c.l.b16 %v61
    %v362 = vunpack.c.l.b16 %v62
    %v363 = vunpack.c.l.b16 %v63
    %v364 = vunpack.c.l.b16 %v64
    %v365 = vunpack.c.l.b16 %v65
    %v366 = vunpack.c.l.b16 %v66
    %v367 = vunpack.c.l.b16 %v67
    %v368 = vunpack.c.l.b16 %v68
    %v369 = vunpack.c.l.b16 %v69
    %v370 = vunpack.c.l.b16 %v70
    %v371 = vunpack.c.l.b16 %v71
    %v372 = vunpack.c.l.b16 %v72
    %v373 = vunpack.c.l.b16 %v73
    %v374 = vunpack.c.l.b16 %v74
    %v375 = vunpack.c.l.b16 %v75
    %v376 = vunpack.c.l.b16 %v76
    %v377 = vunpack.c.l.b16 %v77
    %v378 = vunpack.c.l.b16 %v78
    %v379 = vunpack.c.l.b16 %v79
    %v380 = vunpack.c.l.b16 %v80
    %v381 = vunpack.c.l.b16 %v81
    %v382 = vunpack.c.l.b16 %v82
    %v383 = vunpack.c.l.b16 %v83
    %v384 = vunpack.c.l.b16 %v84
    %v385 = vunpack.c.l.b16 %v85
    %v386 = vunpack.c.l.b16 %v86
    %v387 = vunpack.c.l.b16 %v87
    %v388 = vunpack.c.l.b16 %v88
    %v389 = vunpack.c.l.b16 %v89
    %v390 = vunpack.c.l.b16 %v90
    %v391 = vunpack.c.l.b16 %v91
    %v392 = vunpack.c.l.b16 %v92
    %v393 = vunpack.c.l.b16 %v93
    %v394 = vunpack.c.l.b16 %v94
    %v395 = vunpack.c.l.b16 %v95
    %v396 = vunpack.c.l.b16 %v96
    %v397 = vunpack.c.l.b16 %v97
    %v398 = vunpack.c.l.b16 %v98
    %v399 = vunpack.c.l.b16 %v99
    %v400 = vunpack.c.l.b16 %v100
    %v401 = vunpack.c.l.b16 %v101
    %v402 = vunpack.c.l.b16 %v102
    %v403 = vunpack.c.l.b16 %v103
    %v404 = vunpack.c.l.b16 %v104
    %v405 = vunpack.c.l.b16 %v105
    %v406 = vunpack.c.l.b16 %v106
    %v407 = vunpack.c.l.b16 %v107
    %v408 = vunpack.c.l.b16 %v108
    %v409 = vunpack.c.l.b16 %v109
    %v410 = vunpack.c.l.b16 %v110
    %v411 = vunpack.c.l.b16 %v111
    %v412 = vunpack.c.l.b16 %v112
    %v413 = vunpack.c.l.b16 %v113
    %v414 = vunpack.c.l.b16 %v114
    %v415 = vunpack.c.l.b16 %v115
    %v416 = vunpack.c.l.b16 %v116
    %v417 = vunpack.c.l.b16 %v117
    %v418 = vunpack.c.l.b16 %v118
    %v419 = vunpack.c.l.b16 %v119
    %v420 = vunpack.c.l.b16 %v120
    %v421 = vunpack.c.l.b16 %v121
    %v422 = vunpack.c.l.b16 %v122
    %v423 = vunpack.c.l.b16 %v123
    %v424 = vunpack.c.l.b16 %v124
    %v425 = vunpack.c.l.b16 %v125
    %v426 = vunpack.c.l.b16 %v126
    %v427 = vunpack.c.l.b16 %v127
    %v428 = vunpack.c.l.b16 %v128
    %v429 = vunpack.c.l.b16 %v129
    %v430 = vunpack.c.l.b16 %v130
    %v431 = vunpack.c.l.b16 %v131
    %v432 = vunpack.c.l.b16 %v132
    %v433 = vunpack.c.l.b16 %v133
    %v434 = vunpack.c.l.b16 %v134
    %v435 = vunpack.c.l.b16 %v135
    %v436 = vunpack.c.l.b16 %v136
    %v437 = vunpack.c.l.b16 %v137
    %v438 = vunpack.c.l.b16 %v138
    %v439 = vunpack.c.l.b16 %v139
    %v440 = vunpack.c.l.b16 %v140
    %v441 = vunpack.c.l.b16 %v141
    %v442 = vunpack.c.l.b16 %v142
    %v443 = vunpack.c.l.b16 %v143
    %v444 = vunpack.c.l.b16 %v144
    %v445 = vunpack.c.l.b16 %v145
    %v446 = vunpack.c.l.b16 %v146
    %v447 = vunpack.c.l.b16 %v147
    %v448 = vunpack.c.l.b16 %v148
    %v449 = vunpack.c.l.b16 %v149
    %v450 = vunpack.c.l.b16 %v150
    %v451 = vunpack.c.l.b16 %v151
    %v452 = vunpack.c.l.b16 %v152
    %v453 = vunpack.c.l.b16 %v153
    %v454 = vunpack.c.l.b16 %v154
    %v455 = vunpack.c.l.b16 %v155
    %v456 = vunpack.c.l.b16 %v156
    %v457 = vunpack.c.l.b16 %v157
    %v458 = vunpack.c.l.b16 %v158
    %v459 = vunpack.c.l.b16 %v159
    %v460 = vunpack.c.l.b16 %v160
    %v461 = vunpack.c.l.b16 %v161
    %v462 = vunpack.c.l.b16 %v162
    %v463 = vunpack.c.l.b16 %v163
    %v464 = vunpack.c.l.b16 %v164
    %v465 = vunpack.c.l.b16 %v165
    %v466 = vunpack.c.l.b16 %v166
    %v467 = vunpack.c.l.b16 %v167
    %v468 = vunpack.c.l.b16 %v168
    %v469 = vunpack.c.l.b16 %v169
    %v470 = vunpack.c.l.b16 %v170
    %v471 = vunpack.c.l.b16 %v171
    %v472 = vunpack.c.l.b16 %v172
    %v473 = vunpack.c.l.b16 %v173
    %v474 = vunpack.c.l.b16 %v174
    %v475 = vunpack.c.l.b16 %v175
    %v476 = vunpack.c.l.b16 %v176
    %v477 = vunpack.c.l.b16 %v177
    %v478 = vpack.c.b16 %v351, %v350
    %v479 = vpack.c.b16 %v353, %v352
    %v480 = vpack.c.b16 %v355, %v354
    %v481 = vpack.c.b16 %v357, %v356
    %v482 = vpack.c.b16 %v359, %v358
    %v483 = vpack.c.b16 %v361, %v360
    %v484 = vpack.c.b16 %v363, %v362
    %v485 = vpack.c.b16 %v365, %v364
    %v486 = vpack.c.b16 %v367, %v366
    %v487 = vpack.c.b16 %v369, %v368
    %v488 = vpack.c.b16 %v371, %v370
    %v489 = vpack.c.b16 %v373, %v372
    %v490 = vpack.c.b16 %v375, %v374
    %v491 = vpack.c.b16 %v377, %v376
    %v492 = vpack.c.b16 %v379, %v378
    %v493 = vpack.c.b16 %v381, %v380
    %v494 = vpack.c.b16 %v383, %v382
    %v495 = vpack.c.b16 %v385, %v384
    %v496 = vpack.c.b16 %v387, %v386
    %v497 = vpack.c.b16 %v389, %v388
    %v498 = vpack.c.b16 %v391, %v390
    %v499 = vpack.c.b16 %v393, %v392
    %v500 = vpack.c.b16 %v395, %v394
    %v501 = vpack.c.b16 %v397, %v396
    %v502 = vpack.c.b16 %v399, %v398
    %v503 = vpack.c.b16 %v401, %v400
    %v504 = vpack.c.b16 %v403, %v402
    %v505 = vpack.c.b16 %v405, %v404
    %v506 = vpack.c.b16 %v407, %v406
    %v507 = vpack.c.b16 %v409, %v408
    %v508 = vpack.c.b16 %v411, %v410
    %v509 = vpack.c.b16 %v413, %v412
    %v510 = vpack.c.b16 %v415, %v414
    %v511 = vpack.c.b16 %v417, %v416
    %v512 = vpack.c.b16 %v419, %v418
    %v513 = vpack.c.b16 %v421, %v420
    %v514 = vpack.c.b16 %v423, %v422
    %v515 = vpack.c.b16 %v425, %v424
    %v516 = vpack.c.b16 %v427, %v426
    %v517 = vpack.c.b16 %v429, %v428
    %v518 = vpack.c.b16 %v431, %v430
    %v519 = vpack.c.b16 %v433, %v432
    %v520 = vpack.c.b16 %v435, %v434
    %v521 = vpack.c.b16 %v437, %v436
    %v522 = vpack.c.b16 %v439, %v438
    %v523 = vpack.c.b16 %v441, %v440
    %v524 = vpack.c.b16 %v443, %v442
    %v525 = vpack.c.b16 %v445, %v444
    %v526 = vpack.c.b16 %v447, %v446
    %v527 = vpack.c.b16 %v449, %v448
    %v528 = vpack.c.b16 %v451, %v450
    %v529 = vpack.c.b16 %v453, %v452
    %v530 = vpack.c.b16 %v455, %v454
    %v531 = vpack.c.b16 %v457, %v456
    %v532 = vpack.c.b16 %v459, %v458
    %v533 = vpack.c.b16 %v461, %v460
    %v534 = vpack.c.b16 %v463, %v462
    %v535 = vpack.c.b16 %v465, %v464
    %v536 = vpack.c.b16 %v467, %v466
    %v537 = vpack.c.b16 %v469, %v468
    %v538 = vpack.c.b16 %v471, %v470
    %v539 = vpack.c.b16 %v473, %v472
    %v540 = vpack.c.b16 %v475, %v474
    %v541 = vpack.c.b16 %v477, %v476
    %606 = vmatpush.bf16.msra.mxu0 %v485
    %607 = vmatpush.bf16.msra.mxu0 %v484
    %608 = vmatpush.bf16.msra.mxu0 %v483
    %609 = vmatpush.bf16.msra.mxu0 %v482
    %610 = vmatpush.bf16.msra.mxu0 %v481
    %611 = vmatpush.bf16.msra.mxu0 %v480
    %612 = vmatpush.bf16.msra.mxu0 %v479
    %613 = vmatpush.bf16.msra.mxu0 %v478
    %614 = vmatmul.bf16.gmra.mxu0 %v206
    %v615 = vpop.f32.mrf.mxu0
    %v616 = vadd.f32 %v180, %v615
    %v617 = vpop.f32.mrf.mxu0
    %v618 = vadd.f32 %v180, %v617
    %619 = vdwg.mxu0
    %620 = vmatpush.bf16.msra.mxu0 %v493
    %621 = vmatpush.bf16.msra.mxu0 %v492
    %622 = vmatpush.bf16.msra.mxu0 %v491
    %623 = vmatpush.bf16.msra.mxu0 %v490
    %624 = vmatpush.bf16.msra.mxu0 %v489
    %625 = vmatpush.bf16.msra.mxu0 %v488
    %626 = vmatpush.bf16.msra.mxu0 %v487
    %627 = vmatpush.bf16.msra.mxu0 %v486
    %628 = vmatmul.bf16.gmra.mxu0 %v207
    %v629 = vpop.f32.mrf.mxu0
    %v630 = vadd.f32 %v616, %v629
    %v631 = vpop.f32.mrf.mxu0
    %v632 = vadd.f32 %v618, %v631
    %633 = vdwg.mxu0
    %634 = vmatpush.bf16.msra.mxu0 %v501
    %635 = vmatpush.bf16.msra.mxu0 %v500
    %636 = vmatpush.bf16.msra.mxu0 %v499
    %637 = vmatpush.bf16.msra.mxu0 %v498
    %638 = vmatpush.bf16.msra.mxu0 %v497
    %639 = vmatpush.bf16.msra.mxu0 %v496
    %640 = vmatpush.bf16.msra.mxu0 %v495
    %641 = vmatpush.bf16.msra.mxu0 %v494
    %642 = vmatmul.bf16.gmra.mxu0 %v208
    %v643 = vpop.f32.mrf.mxu0
    %v644 = vadd.f32 %v630, %v643
    %v645 = vpop.f32.mrf.mxu0
    %v646 = vadd.f32 %v632, %v645
    %647 = vdwg.mxu0
    %648 = vmatpush.bf16.msra.mxu0 %v509
    %649 = vmatpush.bf16.msra.mxu0 %v508
    %650 = vmatpush.bf16.msra.mxu0 %v507
    %651 = vmatpush.bf16.msra.mxu0 %v506
    %652 = vmatpush.bf16.msra.mxu0 %v505
    %653 = vmatpush.bf16.msra.mxu0 %v504
    %654 = vmatpush.bf16.msra.mxu0 %v503
    %655 = vmatpush.bf16.msra.mxu0 %v502
    %656 = vmatmul.bf16.gmra.mxu0 %v209
    %v657 = vpop.f32.mrf.mxu0
    %v658 = vadd.f32 %v644, %v657
    %v659 = vpop.f32.mrf.mxu0
    %v660 = vadd.f32 %v646, %v659
    %661 = vdwg.mxu0
    %662 = vmatpush.bf16.msra.mxu0 %v517
    %663 = vmatpush.bf16.msra.mxu0 %v516
    %664 = vmatpush.bf16.msra.mxu0 %v515
    %665 = vmatpush.bf16.msra.mxu0 %v514
    %666 = vmatpush.bf16.msra.mxu0 %v513
    %667 = vmatpush.bf16.msra.mxu0 %v512
    %668 = vmatpush.bf16.msra.mxu0 %v511
    %669 = vmatpush.bf16.msra.mxu0 %v510
    %670 = vmatmul.bf16.gmra.mxu0 %v210
    %v671 = vpop.f32.mrf.mxu0
    %v672 = vadd.f32 %v658, %v671
    %v673 = vpop.f32.mrf.mxu0
    %v674 = vadd.f32 %v660, %v673
    %675 = vdwg.mxu0
    %676 = vmatpush.bf16.msra.mxu0 %v525
    %677 = vmatpush.bf16.msra.mxu0 %v524
    %678 = vmatpush.bf16.msra.mxu0 %v523
    %679 = vmatpush.bf16.msra.mxu0 %v522
    %680 = vmatpush.bf16.msra.mxu0 %v521
    %681 = vmatpush.bf16.msra.mxu0 %v520
    %682 = vmatpush.bf16.msra.mxu0 %v519
    %683 = vmatpush.bf16.msra.mxu0 %v518
    %684 = vmatmul.bf16.gmra.mxu0 %v211
    %v685 = vpop.f32.mrf.mxu0
    %v686 = vadd.f32 %v672, %v685
    %v687 = vpop.f32.mrf.mxu0
    %v688 = vadd.f32 %v674, %v687
    %689 = vdwg.mxu0
    %690 = vmatpush.bf16.msra.mxu0 %v533
    %691 = vmatpush.bf16.msra.mxu0 %v532
    %692 = vmatpush.bf16.msra.mxu0 %v531
    %693 = vmatpush.bf16.msra.mxu0 %v530
    %694 = vmatpush.bf16.msra.mxu0 %v529
    %695 = vmatpush.bf16.msra.mxu0 %v528
    %696 = vmatpush.bf16.msra.mxu0 %v527
    %697 = vmatpush.bf16.msra.mxu0 %v526
    %698 = vmatmul.bf16.gmra.mxu0 %v212
    %v699 = vpop.f32.mrf.mxu0
    %v700 = vadd.f32 %v686, %v699
    %v701 = vpop.f32.mrf.mxu0
    %v702 = vadd.f32 %v688, %v701
    %703 = vdwg.mxu0
    %704 = vmatpush.bf16.msra.mxu0 %v541
    %705 = vmatpush.bf16.msra.mxu0 %v540
    %706 = vmatpush.bf16.msra.mxu0 %v539
    %707 = vmatpush.bf16.msra.mxu0 %v538
    %708 = vmatpush.bf16.msra.mxu0 %v537
    %709 = vmatpush.bf16.msra.mxu0 %v536
    %710 = vmatpush.bf16.msra.mxu0 %v535
    %711 = vmatpush.bf16.msra.mxu0 %v534
    %712 = vmatmul.bf16.gmra.mxu0 %v213
    %v713 = vpop.f32.mrf.mxu0
    %v714 = vadd.f32 %v700, %v713
    %v715 = vpop.f32.mrf.mxu0
    %v716 = vadd.f32 %v702, %v715
    %717 = vdwg.mxu0
    %v718 = vmax.f32 %v714, 0.0
    %v719 = vmax.f32 %v716, 0.0
    %v720 = vpack.c.bf16 %v719, %v718
    %v721 = vld [vmem:[%s3] sm:$0xf]
    %v722 = vld [vmem:[%s3 + $0x4] sm:$0xf]
    %v723 = vld [vmem:[%s3 + $0x8] sm:$0xf]
    %v724 = vld [vmem:[%s3 + $0xc] sm:$0xf]
    %v725 = vld [vmem:[%s3 + $0x10] sm:$0xf]
    %v726 = vld [vmem:[%s3 + $0x14] sm:$0xf]
    %v727 = vld [vmem:[%s3 + $0x18] sm:$0xf]
    %v728 = vld [vmem:[%s3 + $0x1c] sm:$0xf]
    %v729 = vld [vmem:[%s3 + $0x20] sm:$0xf]
    %v730 = vld [vmem:[%s3 + $0x24] sm:$0xf]
    %v731 = vld [vmem:[%s3 + $0x28] sm:$0xf]
    %v732 = vld [vmem:[%s3 + $0x2c] sm:$0xf]
    %v733 = vld [vmem:[%s3 + $0x30] sm:$0xf]
    %v734 = vld [vmem:[%s3 + $0x34] sm:$0xf]
    %v735 = vld [vmem:[%s3 + $0x38] sm:$0xf]
    %v736 = vld [vmem:[%s3 + $0x3c] sm:$0xf]
    %v737 = vld [vmem:[%s4] sm:$0x1]
    %v739 = vperm.slane %v737, 0
    %v757 = vunpack.c.l.b16 %v721
    %v758 = vunpack.c.l.b16 %v722
    %v759 = vunpack.c.l.b16 %v723
    %v760 = vunpack.c.l.b16 %v724
    %v761 = vunpack.c.l.b16 %v725
    %v762 = vunpack.c.l.b16 %v726
    %v763 = vunpack.c.l.b16 %v727
    %v764 = vunpack.c.l.b16 %v728
    %v765 = vunpack.c.l.b16 %v729
    %v766 = vunpack.c.l.b16 %v730
    %v767 = vunpack.c.l.b16 %v731
    %v768 = vunpack.c.l.b16 %v732
    %v769 = vunpack.c.l.b16 %v733
    %v770 = vunpack.c.l.b16 %v734
    %v771 = vunpack.c.l.b16 %v735
    %v772 = vunpack.c.l.b16 %v736
    %v773 = vpack.c.b16 %v758, %v757
    %v774 = vpack.c.b16 %v760, %v759
    %v775 = vpack.c.b16 %v762, %v761
    %v776 = vpack.c.b16 %v764, %v763
    %v777 = vpack.c.b16 %v766, %v765
    %v778 = vpack.c.b16 %v768, %v767
    %v779 = vpack.c.b16 %v770, %v769
    %v780 = vpack.c.b16 %v772, %v771
    %789 = vmatpush.bf16.msra.mxu0 %v780
    %790 = vmatpush.bf16.msra.mxu0 %v779
    %791 = vmatpush.bf16.msra.mxu0 %v778
    %792 = vmatpush.bf16.msra.mxu0 %v777
    %793 = vmatpush.bf16.msra.mxu0 %v776
    %794 = vmatpush.bf16.msra.mxu0 %v775
    %795 = vmatpush.bf16.msra.mxu0 %v774
    %796 = vmatpush.bf16.msra.mxu0 %v773
    %797 = vmatmul.bf16.gmra.mxu0 %v720
    %v798 = vpop.f32.mrf.mxu0
    %v799 = vadd.f32 %v739, %v798
    %v800 = vpop.f32.mrf.mxu0
    %v801 = vadd.f32 %v739, %v800
    %802 = vdwg.mxu0
    %v803 = vmax.f32 %v799, 0.0
    %v804 = vmax.f32 %v801, 0.0
    %v805 = vpack.c.bf16 %v804, %v803
    %v806 = vld [vmem:[%s5] sm:$0xf]
    %v807 = vld [vmem:[%s5 + $0x4] sm:$0xf]
    %v808 = vld [vmem:[%s5 + $0x8] sm:$0xf]
    %v809 = vld [vmem:[%s5 + $0xc] sm:$0xf]
    %v810 = vld [vmem:[%s5 + $0x10] sm:$0xf]
    %v811 = vld [vmem:[%s5 + $0x14] sm:$0xf]
    %v812 = vld [vmem:[%s5 + $0x18] sm:$0xf]
    %v813 = vld [vmem:[%s5 + $0x1c] sm:$0xf]
    %v814 = vld [vmem:[%s5 + $0x20] sm:$0xf]
    %v815 = vld [vmem:[%s5 + $0x24] sm:$0xf]
    %v816 = vld [vmem:[%s5 + $0x28] sm:$0xf]
    %v817 = vld [vmem:[%s5 + $0x2c] sm:$0xf]
    %v818 = vld [vmem:[%s5 + $0x30] sm:$0xf]
    %v819 = vld [vmem:[%s5 + $0x34] sm:$0xf]
    %v820 = vld [vmem:[%s5 + $0x38] sm:$0xf]
    %v821 = vld [vmem:[%s5 + $0x3c] sm:$0xf]
    %v822 = vld [vmem:[%s6] sm:$0x1]
    %v824 = vperm.slane %v822, 0
    %v842 = vunpack.c.l.b16 %v806
    %v843 = vunpack.c.l.b16 %v807
    %v844 = vunpack.c.l.b16 %v808
    %v845 = vunpack.c.l.b16 %v809
    %v846 = vunpack.c.l.b16 %v810
    %v847 = vunpack.c.l.b16 %v811
    %v848 = vunpack.c.l.b16 %v812
    %v849 = vunpack.c.l.b16 %v813
    %v850 = vunpack.c.l.b16 %v814
    %v851 = vunpack.c.l.b16 %v815
    %v852 = vunpack.c.l.b16 %v816
    %v853 = vunpack.c.l.b16 %v817
    %v854 = vunpack.c.l.b16 %v818
    %v855 = vunpack.c.l.b16 %v819
    %v856 = vunpack.c.l.b16 %v820
    %v857 = vunpack.c.l.b16 %v821
    %v858 = vpack.c.b16 %v843, %v842
    %v859 = vpack.c.b16 %v845, %v844
    %v860 = vpack.c.b16 %v847, %v846
    %v861 = vpack.c.b16 %v849, %v848
    %v862 = vpack.c.b16 %v851, %v850
    %v863 = vpack.c.b16 %v853, %v852
    %v864 = vpack.c.b16 %v855, %v854
    %v865 = vpack.c.b16 %v857, %v856
    %874 = vmatpush.bf16.msra.mxu0 %v865
    %875 = vmatpush.bf16.msra.mxu0 %v864
    %876 = vmatpush.bf16.msra.mxu0 %v863
    %877 = vmatpush.bf16.msra.mxu0 %v862
    %878 = vmatpush.bf16.msra.mxu0 %v861
    %879 = vmatpush.bf16.msra.mxu0 %v860
    %880 = vmatpush.bf16.msra.mxu0 %v859
    %881 = vmatpush.bf16.msra.mxu0 %v858
    %882 = vmatmul.bf16.gmra.mxu0 %v805
    %v883 = vpop.f32.mrf.mxu0
    %v884 = vadd.f32 %v824, %v883
    %v885 = vpop.f32.mrf.mxu0
    %v886 = vadd.f32 %v824, %v885
    %887 = vdwg.mxu0
    %888 = vst [vmem:[%s7] sm:$0xff] %v884
    %889 = vst [vmem:[%s7 + $0x8] sm:$0xff] %v886
    // Predicated region
    $region34: #{tianshou_net_adapter_forward.1} parent=1 // pred_check
      _
    $region35: #{tianshou_net_adapter_forward.1} parent=1 // pred_check_branch
      %891 = sbr.rel (0) target = $region37
    $region36: #{tianshou_net_adapter_forward.1} parent=1 // pred_region
      _
    $region37: #{tianshou_net_adapter_forward.1} parent=1 // pred_fallthru
      _
    // Predicated region
    $region38: #{tianshou_net_adapter_forward.1} parent=1 // pred_check
      _
    $region39: #{tianshou_net_adapter_forward.1} parent=1 // pred_check_branch
      %893 = sbr.rel (0) target = $region41
    $region40: #{tianshou_net_adapter_forward.1} parent=1 // pred_region
      _
    $region41: #{tianshou_net_adapter_forward.1} parent=1 // pred_fallthru
      _
    %894 = vsyncpa [#allocation3], 1

</llo_original>
